<compile_context>
chip_gen: v7x
topology: tpu7x:2x2x1
jax: 0.10.0
libtpu: 0.0.40
codegen_flags: <defaults>
</compile_context>

<pallas_src>
import math
from functools import partial

import jax
import jax.numpy as jnp
from jax import lax
from jax.experimental import pallas as pl
from jax.experimental.pallas import tpu as pltpu


LANE = 128
MIB = 1024 * 1024

_TQ_CANDIDATES = (256, 128, 64, 32, 16, 8)
_TK_CANDIDATES = (512, 384, 256, 128, 64, 32, 16, 8)


def _round_up(x, m):
    return ((x + m - 1) // m) * m


def _pick_seq_tile(n, candidates, full_if_leq):
    """Full length when short, else the largest candidate tile that divides n."""
    if n <= full_if_leq:
        return n
    for c in candidates:
        if n % c == 0:
            return c
    return n


def _clamp_vmem(nbytes):
    return int(min(max(nbytes, 16 * MIB), 64 * MIB))


# --------------------------------------------------------------------------- #
# Prologue: dense_k / dense_v, computed exactly once per key/value row.
# --------------------------------------------------------------------------- #
def _project_kv_kernel(k_ref, v_ref, wk_ref, bk_ref, wv_ref, bv_ref,
                       ko_ref, vo_ref):
    """Project one row tile of K and V (bf16 MXU operands, f32 accumulate)."""
    kp = jnp.dot(k_ref[...], wk_ref[...],
                 preferred_element_type=jnp.float32) + bk_ref[...]
    vp = jnp.dot(v_ref[...], wv_ref[...],
                 preferred_element_type=jnp.float32) + bv_ref[...]
    ko_ref[...] = kp.astype(ko_ref.dtype)
    vo_ref[...] = vp.astype(vo_ref.dtype)


def _project_kv(k_p, v_p_in, wk, bk, wv, bv):
    nk = k_p.shape[0]
    dk_p, a_p = wk.shape
    dq_p, vo_p = wv.shape
    tr = _pick_seq_tile(nk, _TK_CANDIDATES, 1024)
    assert nk % tr == 0
    grid = (nk // tr,)

    def resident(shape):
        # Same block for every grid step -> stays VMEM-resident.
        return pl.BlockSpec(shape, lambda r: (0, 0))

    vmem = 2 * (tr * dk_p * 2 + tr * dq_p * 2            # k / v tiles (bf16)
                + dk_p * a_p * 2 + dq_p * vo_p * 2       # weights (bf16)
                + 8 * (a_p + vo_p) * 4                   # biases (f32, sublane-padded)
                + tr * a_p * 2 + tr * vo_p * 2)          # outputs (bf16)

    return pl.pallas_call(
        _project_kv_kernel,
        out_shape=(jax.ShapeDtypeStruct((nk, a_p), jnp.bfloat16),
                   jax.ShapeDtypeStruct((nk, vo_p), jnp.bfloat16)),
        grid_spec=pltpu.PrefetchScalarGridSpec(
            num_scalar_prefetch=0,
            grid=grid,
            in_specs=[
                pl.BlockSpec((tr, dk_p), lambda r: (r, 0)),   # k rows
                pl.BlockSpec((tr, dq_p), lambda r: (r, 0)),   # v rows
                resident((dk_p, a_p)),                        # wk
                resident((1, a_p)),                           # bk
                resident((dq_p, vo_p)),                       # wv
                resident((1, vo_p)),                          # bv
            ],
            out_specs=[pl.BlockSpec((tr, a_p), lambda r: (r, 0)),
                       pl.BlockSpec((tr, vo_p), lambda r: (r, 0))],
        ),
        compiler_params=pltpu.CompilerParams(
            dimension_semantics=("parallel",),
            vmem_limit_bytes=_clamp_vmem(2 * vmem),
        ),
    )(k_p, v_p_in, wk, bk, wv, bv)


# --------------------------------------------------------------------------- #
# Flash attention over projected K/V (q projection fused, computed once/q-tile)
# --------------------------------------------------------------------------- #
def _flash_attn_kernel(q_ref, wq_ref, bq_ref, k_ref, v_ref, o_ref,
                       qproj_sc, m_sc, l_sc, acc_sc):
    """One (q-tile, k-tile) step of fused q-projection + online-softmax attention.

    q_ref:        (tq, dq_p) bf16 raw query rows; wq/bq carry the folded scale.
    k_ref/v_ref:  (tk, a_p) / (tk, v_p) bf16 *projected* key / value tiles.
    m_sc/l_sc:    (tq, LANE) f32 lane-replicated online-softmax state.
    """
    ki = pl.program_id(1)

    @pl.when(ki == 0)
    def _init():
        # dense_q (the 1/sqrt(attention_size) scale is folded into wq/bq);
        # stored bf16 so the score matmul gets bf16 MXU operands.
        qp = (jnp.dot(q_ref[...], wq_ref[...],
                      preferred_element_type=jnp.float32) + bq_ref[...])
        qproj_sc[...] = qp.astype(qproj_sc.dtype)
        m_sc[...] = jnp.full_like(m_sc, -jnp.inf)
        l_sc[...] = jnp.zeros_like(l_sc)
        acc_sc[...] = jnp.zeros_like(acc_sc)

    # Scaled scores [tq, tk]: contract the feature axes of both bf16 operands
    # directly on the MXU (no key.T / XLU transpose); accumulate in f32.
    s = lax.dot_general(qproj_sc[...], k_ref[...],
                        dimension_numbers=(((1,), (1,)), ((), ())),
                        preferred_element_type=jnp.float32)

    # Online softmax update -- all rescale math in f32 (v5e-safe).  Row stats
    # are reduced out of the lane-replicated scratch so every scratch
    # load/store stays a full (tq, LANE) vreg access (no masked (tq,1) stores).
    m_prev = jnp.max(m_sc[...], axis=-1, keepdims=True)      # (tq, 1)
    l_prev = jnp.max(l_sc[...], axis=-1, keepdims=True)      # (tq, 1)
    s_max = jnp.max(s, axis=-1, keepdims=True)               # (tq, 1)
    m_next = jnp.maximum(m_prev, s_max)                      # (tq, 1)
    alpha = jnp.exp(m_prev - m_next)                         # (tq, 1)
    p = jnp.exp(s - m_next)                                  # (tq, tk), f32
    l_next = alpha * l_prev + jnp.sum(p, axis=-1, keepdims=True)

    m_sc[...] = jnp.broadcast_to(m_next, m_sc.shape)
    l_sc[...] = jnp.broadcast_to(l_next, l_sc.shape)
    # p is cast to bf16 only after the row-max subtraction (stability), so the
    # PV matmul also runs with bf16 MXU operands and an f32 accumulator.
    acc_sc[...] = alpha * acc_sc[...] + jnp.dot(
        p.astype(v_ref.dtype), v_ref[...], preferred_element_type=jnp.float32)

    @pl.when(ki == pl.num_programs(1) - 1)
    def _finalize():
        l_row = jnp.max(l_sc[...], axis=-1, keepdims=True)
        inv_l = pl.reciprocal(l_row, approx=True)            # EUP vrcp slot
        o_ref[...] = (acc_sc[...] * inv_l).astype(o_ref.dtype)


# --------------------------------------------------------------------------- #
# Parameter prep + wrapper
# --------------------------------------------------------------------------- #
def prepare_params(params, attention_size):
    """Fold the softmax scale into wq/bq, zero-pad feature dims to 128 and cast
    weights to bf16 (MXU operands); biases stay f32.

    Weights are [in, out] (pre-transposed vs torch.nn.Linear); biases [1, out].
    Zero padding is exact: padded input columns hit zero weight rows, padded
    output columns stay identically zero.
    """
    wq, bq, wk, bk, wv, bv = params
    scale = 1.0 / math.sqrt(attention_size)

    dq_p = _round_up(wq.shape[0], LANE)
    dk_p = _round_up(wk.shape[0], LANE)
    a_p = _round_up(wq.shape[1], LANE)
    v_p = _round_up(wv.shape[1], LANE)

    def pad2(a, rows, cols):
        return jnp.pad(a, ((0, rows - a.shape[0]), (0, cols - a.shape[1])))

    wq_p = pad2(wq * scale, dq_p, a_p).astype(jnp.bfloat16)
    bq_p = pad2(bq * scale, 1, a_p).astype(jnp.float32)
    wk_p = pad2(wk, dk_p, a_p).astype(jnp.bfloat16)
    bk_p = pad2(bk, 1, a_p).astype(jnp.float32)
    wv_p = pad2(wv, dq_p, v_p).astype(jnp.bfloat16)   # dense_v consumes query_size features
    bv_p = pad2(bv, 1, v_p).astype(jnp.float32)
    return (wq_p, bq_p, wk_p, bk_p, wv_p, bv_p)


@partial(jax.jit, static_argnames=("attention_size", "tq", "tk"))
def single_head_attention(q, k, v, params, *, attention_size, tq=None, tk=None):
    """q: [Nq, query_size], k: [Nk, key_size], v: [Nk, query_size] -> [Nq, value_size]."""
    value_size = params[4].shape[1]                  # logical (unpadded) value width
    wq, bq, wk, bk, wv, bv = prepare_params(params, attention_size)

    nq, dq = q.shape
    nk, dk = k.shape
    dq_p, a_p = wq.shape
    dk_p = wk.shape[0]
    v_p = wv.shape[1]

    # Lane-dense zero-padded bf16 activations matching the padded weights.
    q_p = jnp.pad(q, ((0, 0), (0, dq_p - dq))).astype(jnp.bfloat16)
    k_p = jnp.pad(k, ((0, 0), (0, dk_p - dk))).astype(jnp.bfloat16)
    v_pd = jnp.pad(v, ((0, 0), (0, dq_p - v.shape[1]))).astype(jnp.bfloat16)

    # Prologue: project K / V exactly once (no per-q-tile dense_k / dense_v).
    kp, vp = _project_kv(k_p, v_pd, wk, bk, wv, bv)

    # Flash grid: Nq tiles on a "parallel" axis (megacore), Nk on "arbitrary".
    if tq is None:
        if nq <= 128:
            tq = nq
        else:
            # >= 2 q-tiles so both v7x TensorCores get work on the parallel axis.
            tq = next((c for c in _TQ_CANDIDATES if c <= nq // 2 and nq % c == 0), nq)
    if tk is None:
        tk = _pick_seq_tile(nk, _TK_CANDIDATES, 1024)
    assert nq % tq == 0 and nk % tk == 0, "sequence lengths must divide tile sizes"
    grid = (nq // tq, nk // tk)

    # VMEM footprint: double-buffered streaming blocks + scratch (weights are
    # small bf16 and no longer live in this kernel except wq, so no Buffered(1)
    # override is needed here).
    vmem = (2 * (tq * dq_p * 2                        # q tiles (bf16)
                 + dq_p * a_p * 2 + 8 * a_p * 4       # wq (bf16) + bq (f32)
                 + tk * a_p * 2 + tk * v_p * 2        # projected K / V tiles (bf16)
                 + tq * v_p * 4)                      # output tiles (f32)
            + tq * a_p * 2                            # qproj scratch (bf16)
            + 2 * tq * LANE * 4                       # m / l scratch (f32)
            + tq * v_p * 4)                           # acc scratch (f32)

    out_padded = pl.pallas_call(
        _flash_attn_kernel,
        out_shape=jax.ShapeDtypeStruct((nq, v_p), jnp.float32),
        grid_spec=pltpu.PrefetchScalarGridSpec(
            num_scalar_prefetch=0,
            grid=grid,
            in_specs=[
                pl.BlockSpec((tq, dq_p), lambda qi, ki: (qi, 0)),   # q rows
                pl.BlockSpec((dq_p, a_p), lambda qi, ki: (0, 0)),   # wq (scaled, resident)
                pl.BlockSpec((1, a_p), lambda qi, ki: (0, 0)),      # bq (scaled, resident)
                pl.BlockSpec((tk, a_p), lambda qi, ki: (ki, 0)),    # projected K tile
                pl.BlockSpec((tk, v_p), lambda qi, ki: (ki, 0)),    # projected V tile
            ],
            out_specs=pl.BlockSpec((tq, v_p), lambda qi, ki: (qi, 0)),
            scratch_shapes=[
                pltpu.VMEM((tq, a_p), jnp.bfloat16),   # projected + scaled q tile
                pltpu.VMEM((tq, LANE), jnp.float32),   # running max (lane-replicated)
                pltpu.VMEM((tq, LANE), jnp.float32),   # running sum (lane-replicated)
                pltpu.VMEM((tq, v_p), jnp.float32),    # output accumulator
            ],
        ),
        compiler_params=pltpu.CompilerParams(
            dimension_semantics=("parallel", "arbitrary"),
            vmem_limit_bytes=_clamp_vmem(2 * vmem),
        ),
    )(q_p, wq, bq, kp, vp)

    # Drop the zero-padded output lanes.
    return out_padded[:, :value_size]


# --------------------------------------------------------------------------- #
# Synthetic parameters, reference, tests
# --------------------------------------------------------------------------- #
def init_params(key, query_size, key_size, value_size, attention_size):
    """Deterministic synthetic parameters (weights [in, out], biases [1, out])."""
    ks = jax.random.split(key, 6)

    def uniform(k_, shape, fan_in):
        bound = 1.0 / math.sqrt(fan_in)
        return jax.random.uniform(k_, shape, jnp.float32, -bound, bound)

    wq = uniform(ks[0], (query_size, attention_size), query_size)
    bq = uniform(ks[1], (1, attention_size), query_size)
    wk = uniform(ks[2], (key_size, attention_size), key_size)
    bk = uniform(ks[3], (1, attention_size), key_size)
    # dense_v maps query_size -> value_size, exactly as the PyTorch module.
    wv = uniform(ks[4], (query_size, value_size), query_size)
    bv = uniform(ks[5], (1, value_size), query_size)
    return (wq, bq, wk, bk, wv, bv)


def reference(q, k, v, params, attention_size):
    wq, bq, wk, bk, wv, bv = params
    query = q @ wq + bq
    key = k @ wk + bk
    value = v @ wv + bv
    g = (query @ key.T) / math.sqrt(attention_size)
    score = jax.nn.softmax(g, axis=-1)
    return jnp.sum(score[..., None] * value, axis=-2)


def _run_case(seed, nq, nk, query_size, key_size, value_size, attention_size,
              tq=None, tk=None, atol=2e-2, rtol=2e-2):
    root = jax.random.PRNGKey(seed)
    kp_, kq, kk, kv = jax.random.split(root, 4)
    params = init_params(kp_, query_size, key_size, value_size, attention_size)
    q = jax.random.normal(kq, (nq, query_size), jnp.float32)
    k = jax.random.normal(kk, (nk, key_size), jnp.float32)
    v = jax.random.normal(kv, (nk, query_size), jnp.float32)

    out = single_head_attention(q, k, v, params, attention_size=attention_size,
                                tq=tq, tk=tk)
    out = jax.block_until_ready(out)

    ref = reference(q, k, v, params, attention_size)
    assert out.shape == (nq, value_size)
    # Tolerance covers bf16 MXU operands and the approximate reciprocal.
    assert jnp.allclose(out, ref, atol=atol, rtol=rtol), (
        f"mismatch vs reference (max abs err "
        f"{float(jnp.max(jnp.abs(out - ref))):.3e})")


if __name__ == "__main__":
    # Small shapes matching the module's forward pass (single grid step,
    # full-length tiles, non-multiple-of-128 feature padding).
    _run_case(0, nq=8, nk=8,
              query_size=32, key_size=32, value_size=16, attention_size=32)
    # Multi-tile case exercising the Nq('parallel') x Nk('arbitrary') grid and
    # the online-softmax accumulators (explicit small tiles to force tiling).
    _run_case(0, nq=256, nk=384,
              query_size=64, key_size=48, value_size=40, attention_size=96,
              tq=128, tk=128)
    # Default tile-selection path (tq=128 -> 2 parallel q tiles, tk=nk).
    _run_case(0, nq=256, nk=384,
              query_size=64, key_size=48, value_size=40, attention_size=96)
    print("KERNEL_OK")
</pallas_src>

<mosaic_0001>
module attributes {stable_mosaic.version = 11 : i64} {
  func.func @_project_kv_kernel(%arg0: i32, %arg1: memref<8x128xbf16, #tpu.memory_space<vmem>>, %arg2: memref<8x128xbf16, #tpu.memory_space<vmem>>, %arg3: memref<128x128xbf16, #tpu.memory_space<vmem>>, %arg4: memref<1x128xf32, #tpu.memory_space<vmem>>, %arg5: memref<128x128xbf16, #tpu.memory_space<vmem>>, %arg6: memref<1x128xf32, #tpu.memory_space<vmem>>, %arg7: memref<8x128xbf16, #tpu.memory_space<vmem>>, %arg8: memref<8x128xbf16, #tpu.memory_space<vmem>>) attributes {dimension_semantics = [#tpu.dimension_semantics<parallel>], iteration_bounds = array<i64: 1>, scalar_prefetch = 0 : i64, scratch_operands = 0 : i64, tpu.core_type = #tpu.core_type<tc>, window_params = [{transform_indices = @transform_0, window_bounds = array<i64: 8, 128>}, {transform_indices = @transform_1, window_bounds = array<i64: 8, 128>}, {pipeline_mode = #tpu.pipeline_mode<synchronous>, transform_indices = @transform_2, window_bounds = array<i64: 128, 128>}, {pipeline_mode = #tpu.pipeline_mode<synchronous>, transform_indices = @transform_3, window_bounds = array<i64: 1, 128>}, {pipeline_mode = #tpu.pipeline_mode<synchronous>, transform_indices = @transform_4, window_bounds = array<i64: 128, 128>}, {pipeline_mode = #tpu.pipeline_mode<synchronous>, transform_indices = @transform_5, window_bounds = array<i64: 1, 128>}, {transform_indices = @transform_6, window_bounds = array<i64: 8, 128>}, {transform_indices = @transform_7, window_bounds = array<i64: 8, 128>}]} {
    %c0 = arith.constant 0 : index
    %c0_0 = arith.constant 0 : index
    %0 = vector.load %arg1[%c0, %c0_0] : memref<8x128xbf16, #tpu.memory_space<vmem>>, vector<8x128xbf16>
    %c0_1 = arith.constant 0 : index
    %c0_2 = arith.constant 0 : index
    %1 = vector.load %arg3[%c0_1, %c0_2] : memref<128x128xbf16, #tpu.memory_space<vmem>>, vector<128x128xbf16>
    %cst = arith.constant dense<0.000000e+00> : vector<8x128xf32>
    %2 = tpu.matmul %0, %1, %cst {dimension_numbers = #tpu.dot_dimension_numbers<[1], [0], [0], [1], [0, 0, 1, 1], [], []>} : vector<8x128xbf16>, vector<128x128xbf16>, vector<8x128xf32> -> vector<8x128xf32>
    %c0_3 = arith.constant 0 : index
    %c0_4 = arith.constant 0 : index
    %3 = vector.load %arg4[%c0_3, %c0_4] : memref<1x128xf32, #tpu.memory_space<vmem>>, vector<1x128xf32>
    %4 = vector.broadcast %3 : vector<1x128xf32> to vector<8x128xf32>
    %5 = arith.addf %2, %4 : vector<8x128xf32>
    %c0_5 = arith.constant 0 : index
    %c0_6 = arith.constant 0 : index
    %6 = vector.load %arg2[%c0_5, %c0_6] : memref<8x128xbf16, #tpu.memory_space<vmem>>, vector<8x128xbf16>
    %c0_7 = arith.constant 0 : index
    %c0_8 = arith.constant 0 : index
    %7 = vector.load %arg5[%c0_7, %c0_8] : memref<128x128xbf16, #tpu.memory_space<vmem>>, vector<128x128xbf16>
    %cst_9 = arith.constant dense<0.000000e+00> : vector<8x128xf32>
    %8 = tpu.matmul %6, %7, %cst_9 {dimension_numbers = #tpu.dot_dimension_numbers<[1], [0], [0], [1], [0, 0, 1, 1], [], []>} : vector<8x128xbf16>, vector<128x128xbf16>, vector<8x128xf32> -> vector<8x128xf32>
    %c0_10 = arith.constant 0 : index
    %c0_11 = arith.constant 0 : index
    %9 = vector.load %arg6[%c0_10, %c0_11] : memref<1x128xf32, #tpu.memory_space<vmem>>, vector<1x128xf32>
    %10 = vector.broadcast %9 : vector<1x128xf32> to vector<8x128xf32>
    %11 = arith.addf %8, %10 : vector<8x128xf32>
    %12 = arith.truncf %5 : vector<8x128xf32> to vector<8x128xbf16>
    %c0_12 = arith.constant 0 : index
    %c0_13 = arith.constant 0 : index
    %13 = vector.load %arg7[%c0_12, %c0_13] : memref<8x128xbf16, #tpu.memory_space<vmem>>, vector<8x128xbf16>
    tpu.vector_store %arg7[%c0_12, %c0_13], %12 {strides = array<i32>} : memref<8x128xbf16, #tpu.memory_space<vmem>>, vector<8x128xbf16>,
    %14 = arith.truncf %11 : vector<8x128xf32> to vector<8x128xbf16>
    %c0_14 = arith.constant 0 : index
    %c0_15 = arith.constant 0 : index
    %15 = vector.load %arg8[%c0_14, %c0_15] : memref<8x128xbf16, #tpu.memory_space<vmem>>, vector<8x128xbf16>
    tpu.vector_store %arg8[%c0_14, %c0_15], %14 {strides = array<i32>} : memref<8x128xbf16, #tpu.memory_space<vmem>>, vector<8x128xbf16>,
    return
  }
  func.func @transform_0(%arg0: i32) -> (i32, i32) {
    %c0_i32 = arith.constant 0 : i32
    %c0_i32_0 = arith.constant 0 : i32
    return %arg0, %c0_i32 : i32, i32
  }
  func.func @transform_1(%arg0: i32) -> (i32, i32) {
    %c0_i32 = arith.constant 0 : i32
    %c0_i32_0 = arith.constant 0 : i32
    return %arg0, %c0_i32 : i32, i32
  }
  func.func @transform_2(%arg0: i32) -> (i32, i32) {
    %c0_i32 = arith.constant 0 : i32
    %c0_i32_0 = arith.constant 0 : i32
    %c0_i32_1 = arith.constant 0 : i32
    return %c0_i32, %c0_i32_0 : i32, i32
  }
  func.func @transform_3(%arg0: i32) -> (i32, i32) {
    %c0_i32 = arith.constant 0 : i32
    %c0_i32_0 = arith.constant 0 : i32
    %c0_i32_1 = arith.constant 0 : i32
    return %c0_i32, %c0_i32_0 : i32, i32
  }
  func.func @transform_4(%arg0: i32) -> (i32, i32) {
    %c0_i32 = arith.constant 0 : i32
    %c0_i32_0 = arith.constant 0 : i32
    %c0_i32_1 = arith.constant 0 : i32
    return %c0_i32, %c0_i32_0 : i32, i32
  }
  func.func @transform_5(%arg0: i32) -> (i32, i32) {
    %c0_i32 = arith.constant 0 : i32
    %c0_i32_0 = arith.constant 0 : i32
    %c0_i32_1 = arith.constant 0 : i32
    return %c0_i32, %c0_i32_0 : i32, i32
  }
  func.func @transform_6(%arg0: i32) -> (i32, i32) {
    %c0_i32 = arith.constant 0 : i32
    %c0_i32_0 = arith.constant 0 : i32
    return %arg0, %c0_i32 : i32, i32
  }
  func.func @transform_7(%arg0: i32) -> (i32, i32) {
    %c0_i32 = arith.constant 0 : i32
    %c0_i32_0 = arith.constant 0 : i32
    return %arg0, %c0_i32 : i32, i32
  }
}

module attributes {stable_mosaic.version = 11 : i64} {
  func.func @_flash_attn_kernel(%arg0: i32, %arg1: i32, %arg2: memref<8x128xbf16, #tpu.memory_space<vmem>>, %arg3: memref<128x128xbf16, #tpu.memory_space<vmem>>, %arg4: memref<1x128xf32, #tpu.memory_space<vmem>>, %arg5: memref<8x128xbf16, #tpu.memory_space<vmem>>, %arg6: memref<8x128xbf16, #tpu.memory_space<vmem>>, %arg7: memref<8x128xf32, #tpu.memory_space<vmem>>, %arg8: memref<8x128xbf16, #tpu.memory_space<vmem>>, %arg9: memref<8x128xf32, #tpu.memory_space<vmem>>, %arg10: memref<8x128xf32, #tpu.memory_space<vmem>>, %arg11: memref<8x128xf32, #tpu.memory_space<vmem>>) attributes {dimension_semantics = [#tpu.dimension_semantics<parallel>, #tpu.dimension_semantics<arbitrary>], iteration_bounds = array<i64: 1, 1>, scalar_prefetch = 0 : i64, scratch_operands = 4 : i64, tpu.core_type = #tpu.core_type<tc>, window_params = [{transform_indices = @transform_0, window_bounds = array<i64: 8, 128>}, {pipeline_mode = #tpu.pipeline_mode<synchronous>, transform_indices = @transform_1, window_bounds = array<i64: 128, 128>}, {pipeline_mode = #tpu.pipeline_mode<synchronous>, transform_indices = @transform_2, window_bounds = array<i64: 1, 128>}, {transform_indices = @transform_3, window_bounds = array<i64: 8, 128>}, {transform_indices = @transform_4, window_bounds = array<i64: 8, 128>}, {transform_indices = @transform_5, window_bounds = array<i64: 8, 128>}]} {
    %c0_i32 = arith.constant 0 : i32
    %0 = arith.cmpi eq, %arg1, %c0_i32 : i32
    %1 = arith.extui %0 : i1 to i32
    %c0_i32_0 = arith.constant 0 : i32
    %2 = arith.cmpi ne, %1, %c0_i32_0 : i32
    scf.if %2 {
      %c0_25 = arith.constant 0 : index
      %c0_26 = arith.constant 0 : index
      %41 = vector.load %arg2[%c0_25, %c0_26] : memref<8x128xbf16, #tpu.memory_space<vmem>>, vector<8x128xbf16>
      %c0_27 = arith.constant 0 : index
      %c0_28 = arith.constant 0 : index
      %42 = vector.load %arg3[%c0_27, %c0_28] : memref<128x128xbf16, #tpu.memory_space<vmem>>, vector<128x128xbf16>
      %cst_29 = arith.constant dense<0.000000e+00> : vector<8x128xf32>
      %43 = tpu.matmul %41, %42, %cst_29 {dimension_numbers = #tpu.dot_dimension_numbers<[1], [0], [0], [1], [0, 0, 1, 1], [], []>} : vector<8x128xbf16>, vector<128x128xbf16>, vector<8x128xf32> -> vector<8x128xf32>
      %c0_30 = arith.constant 0 : index
      %c0_31 = arith.constant 0 : index
      %44 = vector.load %arg4[%c0_30, %c0_31] : memref<1x128xf32, #tpu.memory_space<vmem>>, vector<1x128xf32>
      %45 = vector.broadcast %44 : vector<1x128xf32> to vector<8x128xf32>
      %46 = arith.addf %43, %45 : vector<8x128xf32>
      %47 = arith.truncf %46 : vector<8x128xf32> to vector<8x128xbf16>
      %c0_32 = arith.constant 0 : index
      %c0_33 = arith.constant 0 : index
      %48 = vector.load %arg8[%c0_32, %c0_33] : memref<8x128xbf16, #tpu.memory_space<vmem>>, vector<8x128xbf16>
      tpu.vector_store %arg8[%c0_32, %c0_33], %47 {strides = array<i32>} : memref<8x128xbf16, #tpu.memory_space<vmem>>, vector<8x128xbf16>,
      %cst_34 = arith.constant 0xFF800000 : f32
      %49 = vector.broadcast %cst_34 : f32 to vector<8x128xf32>
      %c0_35 = arith.constant 0 : index
      %c0_36 = arith.constant 0 : index
      %50 = vector.load %arg9[%c0_35, %c0_36] : memref<8x128xf32, #tpu.memory_space<vmem>>, vector<8x128xf32>
      tpu.vector_store %arg9[%c0_35, %c0_36], %49 {strides = array<i32>} : memref<8x128xf32, #tpu.memory_space<vmem>>, vector<8x128xf32>,
      %cst_37 = arith.constant 0.000000e+00 : f32
      %51 = vector.broadcast %cst_37 : f32 to vector<8x128xf32>
      %c0_38 = arith.constant 0 : index
      %c0_39 = arith.constant 0 : index
      %52 = vector.load %arg10[%c0_38, %c0_39] : memref<8x128xf32, #tpu.memory_space<vmem>>, vector<8x128xf32>
      tpu.vector_store %arg10[%c0_38, %c0_39], %51 {strides = array<i32>} : memref<8x128xf32, #tpu.memory_space<vmem>>, vector<8x128xf32>,
      %cst_40 = arith.constant 0.000000e+00 : f32
      %53 = vector.broadcast %cst_40 : f32 to vector<8x128xf32>
      %c0_41 = arith.constant 0 : index
      %c0_42 = arith.constant 0 : index
      %54 = vector.load %arg11[%c0_41, %c0_42] : memref<8x128xf32, #tpu.memory_space<vmem>>, vector<8x128xf32>
      tpu.vector_store %arg11[%c0_41, %c0_42], %53 {strides = array<i32>} : memref<8x128xf32, #tpu.memory_space<vmem>>, vector<8x128xf32>,
    } else {
    }
    %c0 = arith.constant 0 : index
    %c0_1 = arith.constant 0 : index
    %3 = vector.load %arg8[%c0, %c0_1] : memref<8x128xbf16, #tpu.memory_space<vmem>>, vector<8x128xbf16>
    %c0_2 = arith.constant 0 : index
    %c0_3 = arith.constant 0 : index
    %4 = vector.load %arg5[%c0_2, %c0_3] : memref<8x128xbf16, #tpu.memory_space<vmem>>, vector<8x128xbf16>
    %cst = arith.constant dense<0.000000e+00> : vector<8x8xf32>
    %5 = tpu.matmul %3, %4, %cst {dimension_numbers = #tpu.dot_dimension_numbers<[1], [1], [0], [0], [0, 0, 1, 0], [], []>} : vector<8x128xbf16>, vector<8x128xbf16>, vector<8x8xf32> -> vector<8x8xf32>
    %c0_4 = arith.constant 0 : index
    %c0_5 = arith.constant 0 : index
    %6 = vector.load %arg9[%c0_4, %c0_5] : memref<8x128xf32, #tpu.memory_space<vmem>>, vector<8x128xf32>
    %cst_6 = arith.constant dense<0xFF800000> : vector<8xf32>
    %7 = vector.multi_reduction <maximumf>, %6, %cst_6 [1] : vector<8x128xf32> to vector<8xf32>
    %8 = vector.shape_cast %7 : vector<8xf32> to vector<8x1xf32>
    %c0_7 = arith.constant 0 : index
    %c0_8 = arith.constant 0 : index
    %9 = vector.load %arg10[%c0_7, %c0_8] : memref<8x128xf32, #tpu.memory_space<vmem>>, vector<8x128xf32>
    %cst_9 = arith.constant dense<0xFF800000> : vector<8xf32>
    %10 = vector.multi_reduction <maximumf>, %9, %cst_9 [1] : vector<8x128xf32> to vector<8xf32>
    %11 = vector.shape_cast %10 : vector<8xf32> to vector<8x1xf32>
    %cst_10 = arith.constant dense<0xFF800000> : vector<8xf32>
    %12 = vector.multi_reduction <maximumf>, %5, %cst_10 [1] : vector<8x8xf32> to vector<8xf32>
    %13 = vector.shape_cast %12 : vector<8xf32> to vector<8x1xf32>
    %14 = arith.maximumf %8, %13 : vector<8x1xf32>
    %15 = arith.subf %8, %14 : vector<8x1xf32>
    %16 = math.exp %15 : vector<8x1xf32>
    %17 = vector.broadcast %14 : vector<8x1xf32> to vector<8x8xf32>
    %18 = arith.subf %5, %17 : vector<8x8xf32>
    %19 = math.exp %18 : vector<8x8xf32>
    %20 = arith.mulf %16, %11 : vector<8x1xf32>
    %cst_11 = arith.constant dense<0.000000e+00> : vector<8xf32>
    %21 = vector.multi_reduction <add>, %19, %cst_11 [1] : vector<8x8xf32> to vector<8xf32>
    %22 = vector.shape_cast %21 : vector<8xf32> to vector<8x1xf32>
    %23 = arith.addf %20, %22 : vector<8x1xf32>
    %24 = vector.shape_cast %14 : vector<8x1xf32> to vector<8x1xf32>
    %25 = vector.broadcast %24 : vector<8x1xf32> to vector<8x128xf32>
    %c0_12 = arith.constant 0 : index
    %c0_13 = arith.constant 0 : index
    %26 = vector.load %arg9[%c0_12, %c0_13] : memref<8x128xf32, #tpu.memory_space<vmem>>, vector<8x128xf32>
    tpu.vector_store %arg9[%c0_12, %c0_13], %25 {strides = array<i32>} : memref<8x128xf32, #tpu.memory_space<vmem>>, vector<8x128xf32>,
    %27 = vector.shape_cast %23 : vector<8x1xf32> to vector<8x1xf32>
    %28 = vector.broadcast %27 : vector<8x1xf32> to vector<8x128xf32>
    %c0_14 = arith.constant 0 : index
    %c0_15 = arith.constant 0 : index
    %29 = vector.load %arg10[%c0_14, %c0_15] : memref<8x128xf32, #tpu.memory_space<vmem>>, vector<8x128xf32>
    tpu.vector_store %arg10[%c0_14, %c0_15], %28 {strides = array<i32>} : memref<8x128xf32, #tpu.memory_space<vmem>>, vector<8x128xf32>,
    %c0_16 = arith.constant 0 : index
    %c0_17 = arith.constant 0 : index
    %30 = vector.load %arg11[%c0_16, %c0_17] : memref<8x128xf32, #tpu.memory_space<vmem>>, vector<8x128xf32>
    %31 = vector.broadcast %16 : vector<8x1xf32> to vector<8x128xf32>
    %32 = arith.mulf %31, %30 : vector<8x128xf32>
    %33 = arith.truncf %19 : vector<8x8xf32> to vector<8x8xbf16>
    %c0_18 = arith.constant 0 : index
    %c0_19 = arith.constant 0 : index
    %34 = vector.load %arg6[%c0_18, %c0_19] : memref<8x128xbf16, #tpu.memory_space<vmem>>, vector<8x128xbf16>
    %cst_20 = arith.constant dense<0.000000e+00> : vector<8x128xf32>
    %35 = tpu.matmul %33, %34, %cst_20 {dimension_numbers = #tpu.dot_dimension_numbers<[1], [0], [0], [1], [0, 0, 1, 1], [], []>} : vector<8x8xbf16>, vector<8x128xbf16>, vector<8x128xf32> -> vector<8x128xf32>
    %36 = arith.addf %32, %35 : vector<8x128xf32>
    %c0_21 = arith.constant 0 : index
    %c0_22 = arith.constant 0 : index
    %37 = vector.load %arg11[%c0_21, %c0_22] : memref<8x128xf32, #tpu.memory_space<vmem>>, vector<8x128xf32>
    tpu.vector_store %arg11[%c0_21, %c0_22], %36 {strides = array<i32>} : memref<8x128xf32, #tpu.memory_space<vmem>>, vector<8x128xf32>,
    %c0_i32_23 = arith.constant 0 : i32
    %38 = arith.cmpi eq, %arg1, %c0_i32_23 : i32
    %39 = arith.extui %38 : i1 to i32
    %c0_i32_24 = arith.constant 0 : i32
    %40 = arith.cmpi ne, %39, %c0_i32_24 : i32
    scf.if %40 {
      %c0_25 = arith.constant 0 : index
      %c0_26 = arith.constant 0 : index
      %41 = vector.load %arg10[%c0_25, %c0_26] : memref<8x128xf32, #tpu.memory_space<vmem>>, vector<8x128xf32>
      %cst_27 = arith.constant dense<0xFF800000> : vector<8xf32>
      %42 = vector.multi_reduction <maximumf>, %41, %cst_27 [1] : vector<8x128xf32> to vector<8xf32>
      %43 = vector.shape_cast %42 : vector<8xf32> to vector<8x1xf32>
      %44 = tpu.reciprocal %43 {approx = true} : vector<8x1xf32> -> vector<8x1xf32>
      %c0_28 = arith.constant 0 : index
      %c0_29 = arith.constant 0 : index
      %45 = vector.load %arg11[%c0_28, %c0_29] : memref<8x128xf32, #tpu.memory_space<vmem>>, vector<8x128xf32>
      %46 = vector.broadcast %44 : vector<8x1xf32> to vector<8x128xf32>
      %47 = arith.mulf %45, %46 : vector<8x128xf32>
      %c0_30 = arith.constant 0 : index
      %c0_31 = arith.constant 0 : index
      %48 = vector.load %arg7[%c0_30, %c0_31] : memref<8x128xf32, #tpu.memory_space<vmem>>, vector<8x128xf32>
      tpu.vector_store %arg7[%c0_30, %c0_31], %47 {strides = array<i32>} : memref<8x128xf32, #tpu.memory_space<vmem>>, vector<8x128xf32>,
    } else {
    }
    return
  }
  func.func @transform_0(%arg0: i32, %arg1: i32) -> (i32, i32) {
    %c0_i32 = arith.constant 0 : i32
    %c0_i32_0 = arith.constant 0 : i32
    return %arg0, %c0_i32 : i32, i32
  }
  func.func @transform_1(%arg0: i32, %arg1: i32) -> (i32, i32) {
    %c0_i32 = arith.constant 0 : i32
    %c0_i32_0 = arith.constant 0 : i32
    %c0_i32_1 = arith.constant 0 : i32
    return %c0_i32, %c0_i32_0 : i32, i32
  }
  func.func @transform_2(%arg0: i32, %arg1: i32) -> (i32, i32) {
    %c0_i32 = arith.constant 0 : i32
    %c0_i32_0 = arith.constant 0 : i32
    %c0_i32_1 = arith.constant 0 : i32
    return %c0_i32, %c0_i32_0 : i32, i32
  }
  func.func @transform_3(%arg0: i32, %arg1: i32) -> (i32, i32) {
    %c0_i32 = arith.constant 0 : i32
    %c0_i32_0 = arith.constant 0 : i32
    return %arg1, %c0_i32 : i32, i32
  }
  func.func @transform_4(%arg0: i32, %arg1: i32) -> (i32, i32) {
    %c0_i32 = arith.constant 0 : i32
    %c0_i32_0 = arith.constant 0 : i32
    return %arg1, %c0_i32 : i32, i32
  }
  func.func @transform_5(%arg0: i32, %arg1: i32) -> (i32, i32) {
    %c0_i32 = arith.constant 0 : i32
    %c0_i32_0 = arith.constant 0 : i32
    return %arg0, %c0_i32 : i32, i32
  }
}

</mosaic_0001>

<llo_original>
// kernel: single_head_attention.2
$region0: #{single_head_attention.2}
  #allocation0 [shape = 'u32[]', space=smem, size = 0x4, offset = 0x4, fixed_abs, tag = 'smem constant byte address 0x4 - core index']
  #allocation1 [shape = 'u32[144,128]{1,0:T(1,128)}', space=vmem, size = 0x12000, scoped, tag = 'internal scratch']
  %s0 = inlined_call_operand.vmem [shape: bf16[8,128], index: 0, kind: input, shape index: {}]
  %s1 = inlined_call_operand.vmem [shape: bf16[8,128], index: 1, kind: input, shape index: {}]
  %s2 = inlined_call_operand.vmem [shape: bf16[128,128], index: 2, kind: input, shape index: {}]
  %s3 = inlined_call_operand.vmem [shape: f32[1,128], index: 3, kind: input, shape index: {}]
  %s4 = inlined_call_operand.vmem [shape: bf16[128,128], index: 4, kind: input, shape index: {}]
  %s5 = inlined_call_operand.vmem [shape: f32[1,128], index: 5, kind: input, shape index: {}]
  %s6 = inlined_call_operand.vmem [shape: bf16[8,128], index: 6, kind: output, shape index: {0}]
  %s7 = inlined_call_operand.vmem [shape: bf16[8,128], index: 7, kind: output, shape index: {1}]
  %8 = xla_tuple %s6, %s7
  %s9 = sld [smem:[#allocation0]]
  $region42: #{single_head_attention.2} parent=0
    _
  %s11 = ssub.s32 1, %s9
  %s12 = scalar_select 0, %s11, %s9
  // Predicated region
  $region2: #{single_head_attention.2} parent=0 // pred_check
    _
  $region3: #{single_head_attention.2} parent=0 // pred_check_branch
    %14 = sbr.rel (0) target = $region5
  $region4: #{single_head_attention.2} parent=0 // pred_region
    _
  $region5: #{single_head_attention.2} parent=0 // pred_fallthru
    _
  // Predicated region
  $region6: #{single_head_attention.2} parent=0 // pred_check
    _
  $region7: #{single_head_attention.2} parent=0 // pred_check_branch
    %16 = sbr.rel (0) target = $region9
  $region8: #{single_head_attention.2} parent=0 // pred_region
    _
  $region9: #{single_head_attention.2} parent=0 // pred_fallthru
    _
  // Predicated region
  $region10: #{single_head_attention.2} parent=0 // pred_check
    _
  $region11: #{single_head_attention.2} parent=0 // pred_check_branch
    %18 = sbr.rel (0) target = $region13
  $region12: #{single_head_attention.2} parent=0 // pred_region
    _
  $region13: #{single_head_attention.2} parent=0 // pred_fallthru
    _
  // Predicated region
  $region14: #{single_head_attention.2} parent=0 // pred_check
    _
  $region15: #{single_head_attention.2} parent=0 // pred_check_branch
    %20 = sbr.rel (0) target = $region17
  $region16: #{single_head_attention.2} parent=0 // pred_region
    _
  $region17: #{single_head_attention.2} parent=0 // pred_fallthru
    _
  // Predicated region
  $region18: #{single_head_attention.2} parent=0 // pred_check
    _
  $region19: #{single_head_attention.2} parent=0 // pred_check_branch
    %22 = sbr.rel (0) target = $region21
  $region20: #{single_head_attention.2} parent=0 // pred_region
    _
  $region21: #{single_head_attention.2} parent=0 // pred_fallthru
    _
  // Predicated region
  $region22: #{single_head_attention.2} parent=0 // pred_check
    _
  $region23: #{single_head_attention.2} parent=0 // pred_check_branch
    %24 = sbr.rel (0) target = $region25
  $region24: #{single_head_attention.2} parent=0 // pred_region
    _
  $region25: #{single_head_attention.2} parent=0 // pred_fallthru
    _
  %v26 = vld [vmem:[%s0] sm:$0xf]
  %v27 = vld [vmem:[%s2] sm:$0xf]
  %v28 = vld [vmem:[%s2 + $0x4] sm:$0xf]
  %v29 = vld [vmem:[%s2 + $0x8] sm:$0xf]
  %v30 = vld [vmem:[%s2 + $0xc] sm:$0xf]
  %v31 = vld [vmem:[%s2 + $0x10] sm:$0xf]
  %v32 = vld [vmem:[%s2 + $0x14] sm:$0xf]
  %v33 = vld [vmem:[%s2 + $0x18] sm:$0xf]
  %v34 = vld [vmem:[%s2 + $0x1c] sm:$0xf]
  %v35 = vld [vmem:[%s2 + $0x20] sm:$0xf]
  %v36 = vld [vmem:[%s2 + $0x24] sm:$0xf]
  %v37 = vld [vmem:[%s2 + $0x28] sm:$0xf]
  %v38 = vld [vmem:[%s2 + $0x2c] sm:$0xf]
  %v39 = vld [vmem:[%s2 + $0x30] sm:$0xf]
  %v40 = vld [vmem:[%s2 + $0x34] sm:$0xf]
  %v41 = vld [vmem:[%s2 + $0x38] sm:$0xf]
  %v42 = vld [vmem:[%s2 + $0x3c] sm:$0xf]
  %v43 = vld [vmem:[%s3] sm:$0x1]
  %v45 = vlaneseq
  %v46 = vshrl.u32 %v45, 7
  %v47 = vsub.s32 0, %v46
  %v48 = vrot.slane %v43, %v47
  %v66 = vunpack.c.l.b16 %v27
  %v67 = vunpack.c.l.b16 %v28
  %v68 = vunpack.c.l.b16 %v29
  %v69 = vunpack.c.l.b16 %v30
  %v70 = vunpack.c.l.b16 %v31
  %v71 = vunpack.c.l.b16 %v32
  %v72 = vunpack.c.l.b16 %v33
  %v73 = vunpack.c.l.b16 %v34
  %v74 = vunpack.c.l.b16 %v35
  %v75 = vunpack.c.l.b16 %v36
  %v76 = vunpack.c.l.b16 %v37
  %v77 = vunpack.c.l.b16 %v38
  %v78 = vunpack.c.l.b16 %v39
  %v79 = vunpack.c.l.b16 %v40
  %v80 = vunpack.c.l.b16 %v41
  %v81 = vunpack.c.l.b16 %v42
  %v82 = vpack.c.b16 %v67, %v66
  %v83 = vpack.c.b16 %v69, %v68
  %v84 = vpack.c.b16 %v71, %v70
  %v85 = vpack.c.b16 %v73, %v72
  %v86 = vpack.c.b16 %v75, %v74
  %v87 = vpack.c.b16 %v77, %v76
  %v88 = vpack.c.b16 %v79, %v78
  %v89 = vpack.c.b16 %v81, %v80
  %98 = vmatprep.subr.bf16.mxu0 0
  %99 = vmatpush1.bf16.msra.mxu0 %v82
  %100 = vmatprep.subr.bf16.mxu0 0
  %101 = vmatpush1.bf16.msra.mxu0 %v83
  %102 = vmatprep.subr.bf16.mxu0 0
  %103 = vmatpush1.bf16.msra.mxu0 %v84
  %104 = vmatprep.subr.bf16.mxu0 0
  %105 = vmatpush1.bf16.msra.mxu0 %v85
  %106 = vmatprep.subr.bf16.mxu0 0
  %107 = vmatpush1.bf16.msra.mxu0 %v86
  %108 = vmatprep.subr.bf16.mxu0 0
  %109 = vmatpush1.bf16.msra.mxu0 %v87
  %110 = vmatprep.subr.bf16.mxu0 0
  %111 = vmatpush1.bf16.msra.mxu0 %v88
  %112 = vmatprep.subr.bf16.mxu0 0
  %113 = vmatpush1.bf16.msra.mxu0 %v89
  %114 = vmatprep.subr.bf16.mxu0 0
  %115 = vmatpush1.bf16.msra.mxu0 0
  %116 = vmatprep.subr.bf16.mxu0 0
  %117 = vmatpush1.bf16.msra.mxu0 0
  %118 = vmatprep.subr.bf16.mxu0 0
  %119 = vmatpush1.bf16.msra.mxu0 0
  %120 = vmatprep.subr.bf16.mxu0 0
  %121 = vmatpush1.bf16.msra.mxu0 0
  %122 = vmatprep.subr.bf16.mxu0 0
  %123 = vmatpush1.bf16.msra.mxu0 0
  %124 = vmatprep.subr.bf16.mxu0 0
  %125 = vmatpush1.bf16.msra.mxu0 0
  %126 = vmatprep.subr.bf16.mxu0 0
  %127 = vmatpush1.bf16.msra.mxu0 0
  %128 = vmatprep.subr.bf16.mxu0 0
  %129 = vmatpush1.bf16.msra.mxu0 0
  %130 = vmatprep.mubr.bf16.mxu0 0
  %131 = vmatmul.mubr.bf16.gmra.mrb[0].mxu0 %v26
  %v132 = vpop.f32.mrb[0].mxu0
  %v133 = vadd.f32 %v48, %v132
  %v134 = vpop.f32.mrb[0].mxu0
  %v135 = vpop.f32.mrb[0].mxu0
  %v136 = vpop.f32.mrb[0].mxu0
  %137 = vdwg.mxu0
  %v138 = vld [vmem:[%s1] sm:$0xf]
  %v139 = vld [vmem:[%s4] sm:$0xf]
  %v140 = vld [vmem:[%s4 + $0x4] sm:$0xf]
  %v141 = vld [vmem:[%s4 + $0x8] sm:$0xf]
  %v142 = vld [vmem:[%s4 + $0xc] sm:$0xf]
  %v143 = vld [vmem:[%s4 + $0x10] sm:$0xf]
  %v144 = vld [vmem:[%s4 + $0x14] sm:$0xf]
  %v145 = vld [vmem:[%s4 + $0x18] sm:$0xf]
  %v146 = vld [vmem:[%s4 + $0x1c] sm:$0xf]
  %v147 = vld [vmem:[%s4 + $0x20] sm:$0xf]
  %v148 = vld [vmem:[%s4 + $0x24] sm:$0xf]
  %v149 = vld [vmem:[%s4 + $0x28] sm:$0xf]
  %v150 = vld [vmem:[%s4 + $0x2c] sm:$0xf]
  %v151 = vld [vmem:[%s4 + $0x30] sm:$0xf]
  %v152 = vld [vmem:[%s4 + $0x34] sm:$0xf]
  %v153 = vld [vmem:[%s4 + $0x38] sm:$0xf]
  %v154 = vld [vmem:[%s4 + $0x3c] sm:$0xf]
  %v155 = vld [vmem:[%s5] sm:$0x1]
  %v157 = vlaneseq
  %v158 = vshrl.u32 %v157, 7
  %v159 = vsub.s32 0, %v158
  %v160 = vrot.slane %v155, %v159
  %v178 = vunpack.c.l.b16 %v139
  %v179 = vunpack.c.l.b16 %v140
  %v180 = vunpack.c.l.b16 %v141
  %v181 = vunpack.c.l.b16 %v142
  %v182 = vunpack.c.l.b16 %v143
  %v183 = vunpack.c.l.b16 %v144
  %v184 = vunpack.c.l.b16 %v145
  %v185 = vunpack.c.l.b16 %v146
  %v186 = vunpack.c.l.b16 %v147
  %v187 = vunpack.c.l.b16 %v148
  %v188 = vunpack.c.l.b16 %v149
  %v189 = vunpack.c.l.b16 %v150
  %v190 = vunpack.c.l.b16 %v151
  %v191 = vunpack.c.l.b16 %v152
  %v192 = vunpack.c.l.b16 %v153
  %v193 = vunpack.c.l.b16 %v154
  %v194 = vpack.c.b16 %v179, %v178
  %v195 = vpack.c.b16 %v181, %v180
  %v196 = vpack.c.b16 %v183, %v182
  %v197 = vpack.c.b16 %v185, %v184
  %v198 = vpack.c.b16 %v187, %v186
  %v199 = vpack.c.b16 %v189, %v188
  %v200 = vpack.c.b16 %v191, %v190
  %v201 = vpack.c.b16 %v193, %v192
  %210 = vmatprep.subr.bf16.mxu0 0
  %211 = vmatpush1.bf16.msra.mxu0 %v194
  %212 = vmatprep.subr.bf16.mxu0 0
  %213 = vmatpush1.bf16.msra.mxu0 %v195
  %214 = vmatprep.subr.bf16.mxu0 0
  %215 = vmatpush1.bf16.msra.mxu0 %v196
  %216 = vmatprep.subr.bf16.mxu0 0
  %217 = vmatpush1.bf16.msra.mxu0 %v197
  %218 = vmatprep.subr.bf16.mxu0 0
  %219 = vmatpush1.bf16.msra.mxu0 %v198
  %220 = vmatprep.subr.bf16.mxu0 0
  %221 = vmatpush1.bf16.msra.mxu0 %v199
  %222 = vmatprep.subr.bf16.mxu0 0
  %223 = vmatpush1.bf16.msra.mxu0 %v200
  %224 = vmatprep.subr.bf16.mxu0 0
  %225 = vmatpush1.bf16.msra.mxu0 %v201
  %226 = vmatprep.subr.bf16.mxu0 0
  %227 = vmatpush1.bf16.msra.mxu0 0
  %228 = vmatprep.subr.bf16.mxu0 0
  %229 = vmatpush1.bf16.msra.mxu0 0
  %230 = vmatprep.subr.bf16.mxu0 0
  %231 = vmatpush1.bf16.msra.mxu0 0
  %232 = vmatprep.subr.bf16.mxu0 0
  %233 = vmatpush1.bf16.msra.mxu0 0
  %234 = vmatprep.subr.bf16.mxu0 0
  %235 = vmatpush1.bf16.msra.mxu0 0
  %236 = vmatprep.subr.bf16.mxu0 0
  %237 = vmatpush1.bf16.msra.mxu0 0
  %238 = vmatprep.subr.bf16.mxu0 0
  %239 = vmatpush1.bf16.msra.mxu0 0
  %240 = vmatprep.subr.bf16.mxu0 0
  %241 = vmatpush1.bf16.msra.mxu0 0
  %242 = vmatprep.mubr.bf16.mxu0 0
  %243 = vmatmul.mubr.bf16.gmra.mrb[0].mxu0 %v138
  %v244 = vpop.f32.mrb[0].mxu0
  %v245 = vadd.f32 %v160, %v244
  %v246 = vpop.f32.mrb[0].mxu0
  %v247 = vpop.f32.mrb[0].mxu0
  %v248 = vpop.f32.mrb[0].mxu0
  %249 = vdwg.mxu0
  %v250 = vpack.c.bf16 %v133, %v133
  %251 = vst [vmem:[%s6] sm:$0xf] %v250
  %v252 = vpack.c.bf16 %v245, %v245
  %253 = vst [vmem:[%s7] sm:$0xf] %v252
  // Predicated region
  $region26: #{single_head_attention.2} parent=0 // pred_check
    _
  $region27: #{single_head_attention.2} parent=0 // pred_check_branch
    %255 = sbr.rel (0) target = $region29
  $region28: #{single_head_attention.2} parent=0 // pred_region
    _
  $region29: #{single_head_attention.2} parent=0 // pred_fallthru
    _
  // Predicated region
  $region30: #{single_head_attention.2} parent=0 // pred_check
    _
  $region31: #{single_head_attention.2} parent=0 // pred_check_branch
    %257 = sbr.rel (0) target = $region33
  $region32: #{single_head_attention.2} parent=0 // pred_region
    _
  $region33: #{single_head_attention.2} parent=0 // pred_fallthru
    _
  // Predicated region
  $region34: #{single_head_attention.2} parent=0 // pred_check
    _
  $region35: #{single_head_attention.2} parent=0 // pred_check_branch
    %259 = sbr.rel (0) target = $region37
  $region36: #{single_head_attention.2} parent=0 // pred_region
    _
  $region37: #{single_head_attention.2} parent=0 // pred_fallthru
    _
  // Predicated region
  $region38: #{single_head_attention.2} parent=0 // pred_check
    _
  $region39: #{single_head_attention.2} parent=0 // pred_check_branch
    %261 = sbr.rel (0) target = $region41
  $region40: #{single_head_attention.2} parent=0 // pred_region
    _
  $region41: #{single_head_attention.2} parent=0 // pred_fallthru
    _

// kernel: single_head_attention.3
$region0: #{single_head_attention.3}
  #allocation0 [shape = 'u32[]', space=smem, size = 0x4, offset = 0x4, fixed_abs, tag = 'smem constant byte address 0x4 - core index']
  #allocation1 [shape = 'u32[144,128]{1,0:T(1,128)}', space=vmem, size = 0x12000, scoped, tag = 'internal scratch']
  #allocation2 [shape = 'bf16[8,128]{1,0:T(8,128)(2,1)}', space=vmem, size = 0x800, scoped, tag = 'scratch operand']
  #allocation3 [shape = 'f32[8,128]{1,0:T(8,128)}', space=vmem, size = 0x1000, scoped, tag = 'scratch operand']
  #allocation4 [shape = 'f32[8,128]{1,0:T(8,128)}', space=vmem, size = 0x1000, scoped, tag = 'scratch operand']
  #allocation5 [shape = 'f32[8,128]{1,0:T(8,128)}', space=vmem, size = 0x1000, scoped, tag = 'scratch operand']
  %s0 = inlined_call_operand.vmem [shape: bf16[8,128], index: 0, kind: input, shape index: {}]
  %s1 = inlined_call_operand.vmem [shape: bf16[128,128], index: 1, kind: input, shape index: {}]
  %s2 = inlined_call_operand.vmem [shape: f32[1,128], index: 2, kind: input, shape index: {}]
  %s3 = inlined_call_operand.vmem [shape: bf16[8,128], index: 3, kind: input, shape index: {}]
  %s4 = inlined_call_operand.vmem [shape: bf16[8,128], index: 4, kind: input, shape index: {}]
  %s5 = inlined_call_operand.hbm [shape: f32[8,128], index: 5, kind: output, shape index: {}]
  %s6 = sld [smem:[#allocation0]]
  $region38: #{single_head_attention.3} parent=0
    _
  %s8 = ssub.s32 1, %s6
  %s9 = scalar_select 0, %s8, %s6
  $region1: #{single_head_attention.3} parent=0
    #allocation6 [shape = 'u8[4096]{0}', space=vmem, size = 0x1000, scoped, tag = 'output window, operand 0, single buffered']
    #allocation7 [shape = 's32[1]{0}', space=sflag, size = 0x4, scoped, tag = 'scoped memory for single_head_attention.3']
    %10 = vsyncpa [#allocation7], 0
    // Predicated region
    $region2: #{single_head_attention.3} parent=1 // pred_check
      _
    $region3: #{single_head_attention.3} parent=1 // pred_check_branch
      %12 = sbr.rel (0) target = $region5
    $region4: #{single_head_attention.3} parent=1 // pred_region
      _
    $region5: #{single_head_attention.3} parent=1 // pred_fallthru
      _
    // Predicated region
    $region6: #{single_head_attention.3} parent=1 // pred_check
      _
    $region7: #{single_head_attention.3} parent=1 // pred_check_branch
      %14 = sbr.rel (0) target = $region9
    $region8: #{single_head_attention.3} parent=1 // pred_region
      _
    $region9: #{single_head_attention.3} parent=1 // pred_fallthru
      _
    // Predicated region
    $region10: #{single_head_attention.3} parent=1 // pred_check
      _
    $region11: #{single_head_attention.3} parent=1 // pred_check_branch
      %16 = sbr.rel (0) target = $region13
    $region12: #{single_head_attention.3} parent=1 // pred_region
      _
    $region13: #{single_head_attention.3} parent=1 // pred_fallthru
      _
    // Predicated region
    $region14: #{single_head_attention.3} parent=1 // pred_check
      _
    $region15: #{single_head_attention.3} parent=1 // pred_check_branch
      %18 = sbr.rel (0) target = $region17
    $region16: #{single_head_attention.3} parent=1 // pred_region
      _
    $region17: #{single_head_attention.3} parent=1 // pred_fallthru
      _
    // Predicated region
    $region18: #{single_head_attention.3} parent=1 // pred_check
      _
    $region19: #{single_head_attention.3} parent=1 // pred_check_branch
      %20 = sbr.rel (0) target = $region21
    $region20: #{single_head_attention.3} parent=1 // pred_region
      _
    $region21: #{single_head_attention.3} parent=1 // pred_fallthru
      _
    %p22 = scmp.eq.s32.totalorder 0, 0
    // Predicated region
    $region22: #{single_head_attention.3} parent=1 // pred_check
      %p23 = pneg %p22
    $region23: #{single_head_attention.3} parent=1 // pred_check_branch
      %25 = sbr.rel (%p23) target = $region25
    $region24: #{single_head_attention.3} parent=1 // pred_region
      %v26 = vld [vmem:[%s0] sm:$0xf]
      %v27 = vld [vmem:[%s1] sm:$0xf]
      %v28 = vld [vmem:[%s1 + $0x4] sm:$0xf]
      %v29 = vld [vmem:[%s1 + $0x8] sm:$0xf]
      %v30 = vld [vmem:[%s1 + $0xc] sm:$0xf]
      %v31 = vld [vmem:[%s1 + $0x10] sm:$0xf]
      %v32 = vld [vmem:[%s1 + $0x14] sm:$0xf]
      %v33 = vld [vmem:[%s1 + $0x18] sm:$0xf]
      %v34 = vld [vmem:[%s1 + $0x1c] sm:$0xf]
      %v35 = vld [vmem:[%s1 + $0x20] sm:$0xf]
      %v36 = vld [vmem:[%s1 + $0x24] sm:$0xf]
      %v37 = vld [vmem:[%s1 + $0x28] sm:$0xf]
      %v38 = vld [vmem:[%s1 + $0x2c] sm:$0xf]
      %v39 = vld [vmem:[%s1 + $0x30] sm:$0xf]
      %v40 = vld [vmem:[%s1 + $0x34] sm:$0xf]
      %v41 = vld [vmem:[%s1 + $0x38] sm:$0xf]
      %v42 = vld [vmem:[%s1 + $0x3c] sm:$0xf]
      %v43 = vld [vmem:[%s2] sm:$0x1]
      %v45 = vlaneseq
      %v46 = vshrl.u32 %v45, 7
      %v47 = vsub.s32 0, %v46
      %v48 = vrot.slane %v43, %v47
      %v66 = vunpack.c.l.b16 %v27
      %v67 = vunpack.c.l.b16 %v28
      %v68 = vunpack.c.l.b16 %v29
      %v69 = vunpack.c.l.b16 %v30
      %v70 = vunpack.c.l.b16 %v31
      %v71 = vunpack.c.l.b16 %v32
      %v72 = vunpack.c.l.b16 %v33
      %v73 = vunpack.c.l.b16 %v34
      %v74 = vunpack.c.l.b16 %v35
      %v75 = vunpack.c.l.b16 %v36
      %v76 = vunpack.c.l.b16 %v37
      %v77 = vunpack.c.l.b16 %v38
      %v78 = vunpack.c.l.b16 %v39
      %v79 = vunpack.c.l.b16 %v40
      %v80 = vunpack.c.l.b16 %v41
      %v81 = vunpack.c.l.b16 %v42
      %v82 = vpack.c.b16 %v67, %v66
      %v83 = vpack.c.b16 %v69, %v68
      %v84 = vpack.c.b16 %v71, %v70
      %v85 = vpack.c.b16 %v73, %v72
      %v86 = vpack.c.b16 %v75, %v74
      %v87 = vpack.c.b16 %v77, %v76
      %v88 = vpack.c.b16 %v79, %v78
      %v89 = vpack.c.b16 %v81, %v80
      %98 = vmatprep.subr.bf16.mxu0 0
      %99 = vmatpush1.bf16.msra.mxu0 %v82
      %100 = vmatprep.subr.bf16.mxu0 0
      %101 = vmatpush1.bf16.msra.mxu0 %v83
      %102 = vmatprep.subr.bf16.mxu0 0
      %103 = vmatpush1.bf16.msra.mxu0 %v84
      %104 = vmatprep.subr.bf16.mxu0 0
      %105 = vmatpush1.bf16.msra.mxu0 %v85
      %106 = vmatprep.subr.bf16.mxu0 0
      %107 = vmatpush1.bf16.msra.mxu0 %v86
      %108 = vmatprep.subr.bf16.mxu0 0
      %109 = vmatpush1.bf16.msra.mxu0 %v87
      %110 = vmatprep.subr.bf16.mxu0 0
      %111 = vmatpush1.bf16.msra.mxu0 %v88
      %112 = vmatprep.subr.bf16.mxu0 0
      %113 = vmatpush1.bf16.msra.mxu0 %v89
      %114 = vmatprep.subr.bf16.mxu0 0
      %115 = vmatpush1.bf16.msra.mxu0 0
      %116 = vmatprep.subr.bf16.mxu0 0
      %117 = vmatpush1.bf16.msra.mxu0 0
      %118 = vmatprep.subr.bf16.mxu0 0
      %119 = vmatpush1.bf16.msra.mxu0 0
      %120 = vmatprep.subr.bf16.mxu0 0
      %121 = vmatpush1.bf16.msra.mxu0 0
      %122 = vmatprep.subr.bf16.mxu0 0
      %123 = vmatpush1.bf16.msra.mxu0 0
      %124 = vmatprep.subr.bf16.mxu0 0
      %125 = vmatpush1.bf16.msra.mxu0 0
      %126 = vmatprep.subr.bf16.mxu0 0
      %127 = vmatpush1.bf16.msra.mxu0 0
      %128 = vmatprep.subr.bf16.mxu0 0
      %129 = vmatpush1.bf16.msra.mxu0 0
      %130 = vmatprep.mubr.bf16.mxu0 0
      %131 = vmatmul.mubr.bf16.gmra.mrb[0].mxu0 %v26
      %v132 = vpop.f32.mrb[0].mxu0
      %v133 = vadd.f32 %v48, %v132
      %v134 = vpop.f32.mrb[0].mxu0
      %v135 = vpop.f32.mrb[0].mxu0
      %v136 = vpop.f32.mrb[0].mxu0
      %137 = vdwg.mxu0
      %v138 = vpack.c.bf16 %v133, %v133
      %139 = vst [vmem:[#allocation2] sm:$0xf] %v138
      %140 = vst [vmem:[#allocation3] sm:$0xff] -inf
      %141 = vst [vmem:[#allocation4] sm:$0xff] 0.0
      %142 = vst [vmem:[#allocation5] sm:$0xff] 0.0
    $region25: #{single_head_attention.3} parent=1 // pred_fallthru
      _
    %v143 = vld [vmem:[#allocation2] sm:$0xf]
    %v144 = vld [vmem:[%s3] sm:$0xf]
    %145 = vmatprep.subr.bf16.mxu0 0
    %146 = vmatpush1.bf16.xpose.msra.mxu0 %v144
    %147 = vmatprep.subr.bf16.mxu0 0
    %148 = vmatpush1.bf16.xpose.msra.mxu0 0
    %149 = vmatprep.subr.bf16.mxu0 0
    %150 = vmatpush1.bf16.xpose.msra.mxu0 0
    %151 = vmatprep.subr.bf16.mxu0 0
    %152 = vmatpush1.bf16.xpose.msra.mxu0 0
    %153 = vmatprep.subr.bf16.mxu0 0
    %154 = vmatpush1.bf16.xpose.msra.mxu0 0
    %155 = vmatprep.subr.bf16.mxu0 0
    %156 = vmatpush1.bf16.xpose.msra.mxu0 0
    %157 = vmatprep.subr.bf16.mxu0 0
    %158 = vmatpush1.bf16.xpose.msra.mxu0 0
    %159 = vmatprep.subr.bf16.mxu0 0
    %160 = vmatpush1.bf16.xpose.msra.mxu0 0
    %161 = vmatprep.subr.bf16.mxu0 0
    %162 = vmatpush1.bf16.xpose.msra.mxu0 0
    %163 = vmatprep.subr.bf16.mxu0 0
    %164 = vmatpush1.bf16.xpose.msra.mxu0 0
    %165 = vmatprep.subr.bf16.mxu0 0
    %166 = vmatpush1.bf16.xpose.msra.mxu0 0
    %167 = vmatprep.subr.bf16.mxu0 0
    %168 = vmatpush1.bf16.xpose.msra.mxu0 0
    %169 = vmatprep.subr.bf16.mxu0 0
    %170 = vmatpush1.bf16.xpose.msra.mxu0 0
    %171 = vmatprep.subr.bf16.mxu0 0
    %172 = vmatpush1.bf16.xpose.msra.mxu0 0
    %173 = vmatprep.subr.bf16.mxu0 0
    %174 = vmatpush1.bf16.xpose.msra.mxu0 0
    %175 = vmatprep.subr.bf16.mxu0 0
    %176 = vmatpush1.bf16.xpose.msra.mxu0 0
    %177 = vmatprep.mubr.bf16.mxu0 0
    %178 = vmatmul.mubr.bf16.gmra.mrb[0].mxu0 %v143
    %v179 = vpop.f32.mrb[0].mxu0
    %v180 = vadd.f32 0.0, %v179
    %v181 = vpop.f32.mrb[0].mxu0
    %v182 = vpop.f32.mrb[0].mxu0
    %v183 = vpop.f32.mrb[0].mxu0
    %184 = vdwg.mxu0
    %v185 = vld [vmem:[#allocation3] sm:$0xff]
    %186 = vmax.xlane.f32.xlu0 %v185
    %v187 = vpop.xlane.xlu0 %186
    %v188 = vld [vmem:[#allocation4] sm:$0xff]
    %189 = vmax.xlane.f32.xlu0 %v188
    %v190 = vpop.xlane.xlu0 %189
    %vm191 = vcmask 64512
    %v192 = vsel %vm191, %v180, -inf
    %193 = vmax.xlane.f32.xlu0 %v192
    %v194 = vpop.xlane.xlu0 %193
    %v195 = vmax.f32 %v187, %v194
    %v196 = vsub.f32 %v187, %v195
    %v197 = vmul.f32 %v196, 1.442695
    %v198 = vpow.pop %v197
    %v199 = vsub.f32 %v180, %v195
    %v200 = vmul.f32 %v199, 1.442695
    %v201 = vpow.pop %v200
    %v202 = vmul.f32 %v198, %v190
    %v203 = vsel %vm191, %v201, 0.0
    %204 = vadd.xlane.f32.xlu0 %v203
    %v205 = vpop.xlane.xlu0 %204
    %v206 = vadd.f32 %v202, %v205
    %207 = vst [vmem:[#allocation3] sm:$0xff] %v195
    %208 = vst [vmem:[#allocation4] sm:$0xff] %v206
    %v209 = vld [vmem:[#allocation5] sm:$0xff]
    %v210 = vmul.f32 %v198, %v209
    %v211 = vpack.c.bf16 %v201, %v201
    %v212 = vld [vmem:[%s4] sm:$0xf]
    %v214 = vsel %vm191, %v211, 0
    %vm216 = vcmask 1043456
    %v218 = vsel %vm216, %v212, 0
    %220 = vmatprep.subr.bf16.mxu0 0
    %221 = vmatpush1.bf16.msra.mxu0 %v218
    %222 = vmatprep.subr.bf16.mxu0 0
    %223 = vmatpush1.bf16.msra.mxu0 0
    %224 = vmatprep.subr.bf16.mxu0 0
    %225 = vmatpush1.bf16.msra.mxu0 0
    %226 = vmatprep.subr.bf16.mxu0 0
    %227 = vmatpush1.bf16.msra.mxu0 0
    %228 = vmatprep.subr.bf16.mxu0 0
    %229 = vmatpush1.bf16.msra.mxu0 0
    %230 = vmatprep.subr.bf16.mxu0 0
    %231 = vmatpush1.bf16.msra.mxu0 0
    %232 = vmatprep.subr.bf16.mxu0 0
    %233 = vmatpush1.bf16.msra.mxu0 0
    %234 = vmatprep.subr.bf16.mxu0 0
    %235 = vmatpush1.bf16.msra.mxu0 0
    %236 = vmatprep.subr.bf16.mxu0 0
    %237 = vmatpush1.bf16.msra.mxu0 0
    %238 = vmatprep.subr.bf16.mxu0 0
    %239 = vmatpush1.bf16.msra.mxu0 0
    %240 = vmatprep.subr.bf16.mxu0 0
    %241 = vmatpush1.bf16.msra.mxu0 0
    %242 = vmatprep.subr.bf16.mxu0 0
    %243 = vmatpush1.bf16.msra.mxu0 0
    %244 = vmatprep.subr.bf16.mxu0 0
    %245 = vmatpush1.bf16.msra.mxu0 0
    %246 = vmatprep.subr.bf16.mxu0 0
    %247 = vmatpush1.bf16.msra.mxu0 0
    %248 = vmatprep.subr.bf16.mxu0 0
    %249 = vmatpush1.bf16.msra.mxu0 0
    %250 = vmatprep.subr.bf16.mxu0 0
    %251 = vmatpush1.bf16.msra.mxu0 0
    %252 = vmatprep.mubr.bf16.mxu0 0
    %253 = vmatmul.mubr.bf16.gmra.mrb[0].mxu0 %v214
    %v254 = vpop.f32.mrb[0].mxu0
    %v255 = vadd.f32 0.0, %v254
    %v256 = vpop.f32.mrb[0].mxu0
    %v257 = vpop.f32.mrb[0].mxu0
    %v258 = vpop.f32.mrb[0].mxu0
    %259 = vdwg.mxu0
    %v260 = vadd.f32 %v210, %v255
    %261 = vst [vmem:[#allocation5] sm:$0xff] %v260
    // Predicated region
    $region26: #{single_head_attention.3} parent=1 // pred_check
      %p262 = pneg %p22
    $region27: #{single_head_attention.3} parent=1 // pred_check_branch
      %264 = sbr.rel (%p262) target = $region29
    $region28: #{single_head_attention.3} parent=1 // pred_region
      %v265 = vld [vmem:[#allocation4] sm:$0xff]
      %266 = vmax.xlane.f32.xlu0 %v265
      %v267 = vpop.xlane.xlu0 %266
      %v268 = vrcp.pop %v267
      %v269 = vld [vmem:[#allocation5] sm:$0xff]
      %v270 = vmul.f32 %v269, %v268
      %271 = vst [vmem:[#allocation6] sm:$0xff] %v270
    $region29: #{single_head_attention.3} parent=1 // pred_fallthru
      _
    // Predicated region
    $region30: #{single_head_attention.3} parent=1 // pred_check
      _
    $region31: #{single_head_attention.3} parent=1 // pred_check_branch
      %273 = sbr.rel (0) target = $region33
    $region32: #{single_head_attention.3} parent=1 // pred_region
      %s275 = ssub.s32 128, 128
      %276 = vsyncadd [#allocation7], %s275
      %s278 = sshll.u32 [#allocation6], 4
      %s279 = int_to_ptr.vmem [resolvable:$true] %s278
      %281 = dma.vmem_to_hbm [thread:$0]  %s279, 128, %s5, [#allocation7]
    $region33: #{single_head_attention.3} parent=1 // pred_fallthru
      _
    // Predicated region
    $region34: #{single_head_attention.3} parent=1 // pred_check
      _
    $region35: #{single_head_attention.3} parent=1 // pred_check_branch
      %283 = sbr.rel (0) target = $region37
    $region36: #{single_head_attention.3} parent=1 // pred_region
      %284 = dma.done [#allocation7], 128
    $region37: #{single_head_attention.3} parent=1 // pred_fallthru
      _
    %285 = vsyncpa [#allocation7], 1

</llo_original>
